<compile_context>
chip_gen: v5e
topology: v5e:2x2
jax: 0.10.0
libtpu: 0.0.40
codegen_flags: <defaults>
</compile_context>

<pallas_src>
import jax
import jax.numpy as jnp
import numpy as np
from jax.experimental import pallas as pl
from jax.experimental.pallas import tpu as pltpu

# ---- model hyperparameters (small, consistent with the module) -------------
B, L, H = 2, 8, 32          # batch, target seq len, hid_dim
NH = 4                      # n_heads
HD = H // NH                # head_dim
PF = 64                     # pf_dim
V = 64                      # output_dim (vocab)
N_LAYERS = 2
PAD_IDX = 0
MAX_LEN = 130
NEG_INF = -1e10
LN_EPS = 1e-5
BL = B * L                  # folded (batch*seq) rows
SL = NH * BL                # sublane-stacked key rows (all heads)

assert PF == SL and V == SL, "64-lane slab packing assumes pf_dim == vocab == NH*B*L"

# ---- packed-slab row offsets (32-lane slab) ---------------------------------
_WQ, _WK, _WV, _WO = 0, H, 2 * H, 3 * H           # 4x (H, H)
_W2 = 4 * H                                       # (PF, H)
_MMEAN = _W2 + PF                                 # (H, H) constant 1/H matrix
_HMST = _MMEAN + H                                # (SL, H) stacked head masks
_MISC = _HMST + SL                                # 9 rows: bq bk bv bo ln1g ln1b b2 ln2g ln2b
_ROWS32 = ((_MISC + 9 + 7) // 8) * 8              # pad to 8-sublane boundary

# ---- packed-slab row offsets (64-lane slab) ---------------------------------
_W1 = 0                                           # (H, PF)
_WFC = H                                          # (H, V)
_BD = 2 * H                                       # (SL, SL) block-diag ones
_B1 = _BD + SL                                    # (1, PF)
_BFC = _B1 + 1                                    # (1, V)
_ROWS64 = ((_BFC + 1 + 7) // 8) * 8

# ---- advisory cost estimate for the XLA scheduler ----------------------------
_FLOPS = (2 * BL * H * H * 4          # q, k, v, o projections
          + 2 * BL * SL * H           # all-head scores
          + 2 * BL * SL * SL          # per-head softmax denominators
          + 2 * BL * SL * H           # context
          + 2 * BL * H * PF * 2       # feed-forward
          + 2 * BL * H * V            # final fc
          + 2 * 4 * BL * H * H)       # 4 LayerNorm statistic matmuls
_TRANS = BL * SL + 2 * BL * H + BL * SL          # exp + rsqrt x2 + approx recip
_BYTES = 4 * (BL * H + BL * SL + _ROWS32 * H + _ROWS64 * SL + BL * V)


# ---------------------------------------------------------------------------
# Fused Pallas kernel: (last) DecoderLayer + final fc, whole batch at once.
# ---------------------------------------------------------------------------
def decoder_kernel(x_ref, bias_ref, s32_ref, s64_ref, out_ref):
    x = x_ref[...]                       # (BL, H)
    bias = bias_ref[...]                 # (BL, SL) head-tiled additive mask

    # Weight slabs (sublane-stacked, static slices).
    wq = s32_ref[_WQ:_WQ + H, :]         # (H, H) -- 1/sqrt(HD) pre-folded
    wk = s32_ref[_WK:_WK + H, :]
    wv = s32_ref[_WV:_WV + H, :]
    wo = s32_ref[_WO:_WO + H, :]
    w2 = s32_ref[_W2:_W2 + PF, :]        # (PF, H)
    m_mean = s32_ref[_MMEAN:_MMEAN + H, :]   # (H, H) = 1/H everywhere
    hm_st = s32_ref[_HMST:_HMST + SL, :]     # (SL, H) stacked head masks
    bq = s32_ref[_MISC + 0:_MISC + 1, :]
    bk = s32_ref[_MISC + 1:_MISC + 2, :]
    bv = s32_ref[_MISC + 2:_MISC + 3, :]
    bo = s32_ref[_MISC + 3:_MISC + 4, :]
    ln1g = s32_ref[_MISC + 4:_MISC + 5, :]
    ln1b = s32_ref[_MISC + 5:_MISC + 6, :]
    b2 = s32_ref[_MISC + 6:_MISC + 7, :]
    ln2g = s32_ref[_MISC + 7:_MISC + 8, :]
    ln2b = s32_ref[_MISC + 8:_MISC + 9, :]

    w1 = s64_ref[_W1:_W1 + H, :]         # (H, PF)
    wfc = s64_ref[_WFC:_WFC + H, :]      # (H, V)
    bd = s64_ref[_BD:_BD + SL, :]        # (SL, SL) block-diag ones
    b1 = s64_ref[_B1:_B1 + 1, :]
    bfc = s64_ref[_BFC:_BFC + 1, :]

    def layer_norm(t, g, b):
        # Row mean / mean-of-squares via MXU; result already lane-broadcast,
        # so no XLU reduction and no explicit broadcast on the critical path.
        mu = jnp.dot(t, m_mean, preferred_element_type=jnp.float32)
        ex2 = jnp.dot(t * t, m_mean, preferred_element_type=jnp.float32)
        var = jnp.maximum(ex2 - mu * mu, 0.0)
        return (t - mu) * jax.lax.rsqrt(var + LN_EPS) * g + b

    # ---- masked multi-head self attention (lane-packed over heads) ---------
    q = jnp.dot(x, wq, preferred_element_type=jnp.float32) + bq
    k = jnp.dot(x, wk, preferred_element_type=jnp.float32) + bk
    v = jnp.dot(x, wv, preferred_element_type=jnp.float32) + bv

    # Per-head masked copies of K / V stacked along sublanes: block h keeps
    # only head h's lanes, so q @ K_st^T yields every head's scores at once.
    k_st = jnp.concatenate([k] * NH, axis=0) * hm_st      # (SL, H)
    v_st = jnp.concatenate([v] * NH, axis=0) * hm_st      # (SL, H)

    nt = (((1,), (1,)), ((), ()))                          # contract last dims
    s_all = jax.lax.dot_general(q, k_st, nt,
                                preferred_element_type=jnp.float32) + bias
    # No row-max subtraction: scores are tightly bounded and exp of the
    # -1e10-biased (masked) entries underflows to exactly 0.
    p = jnp.exp(s_all)                                     # (BL, SL), one exp
    denom = jnp.dot(p, bd, preferred_element_type=jnp.float32)   # per-head sums
    a = p * pl.reciprocal(denom, approx=True)              # EUP slot, ~free
    ctx = jnp.dot(a, v_st, preferred_element_type=jnp.float32)   # (BL, H)

    attn = jnp.dot(ctx, wo, preferred_element_type=jnp.float32) + bo
    t1 = layer_norm(x + attn, ln1g, ln1b)

    # ---- position-wise feed-forward -----------------------------------------
    hid = jnp.maximum(jnp.dot(t1, w1, preferred_element_type=jnp.float32) + b1,
                      0.0)
    ff = jnp.dot(hid, w2, preferred_element_type=jnp.float32) + b2
    y = layer_norm(t1 + ff, ln2g, ln2b)

    # ---- final fc projection -------------------------------------------------
    out_ref[...] = jnp.dot(y, wfc, preferred_element_type=jnp.float32) + bfc


# ---------------------------------------------------------------------------
# One-time parameter packing (hoisted out of the jitted per-call forward).
# ---------------------------------------------------------------------------
def pack_params(params):
    # PyTorch quirk: every layer consumes `x` and overwrites `trg`, so only the
    # LAST layer's output reaches fc; earlier layers are dead compute -> skip.
    lp = params['layers'][-1]
    s = jnp.sqrt(jnp.float32(HD))

    m_mean = jnp.full((H, H), 1.0 / H, jnp.float32)
    head_of_lane = jnp.arange(H) // HD                       # (H,)
    head_of_row = jnp.repeat(jnp.arange(NH), BL)             # (SL,)
    hm_st = (head_of_row[:, None] == head_of_lane[None, :]).astype(jnp.float32)
    misc = jnp.concatenate([lp['bq'] / s, lp['bk'], lp['bv'], lp['bo'],
                            lp['ln1g'], lp['ln1b'], lp['b2'],
                            lp['ln2g'], lp['ln2b']], axis=0)             # (9, H)
    slab32 = jnp.concatenate(
        [lp['wq'] / s, lp['wk'], lp['wv'], lp['wo'], lp['w2'],
         m_mean, hm_st, misc,
         jnp.zeros((_ROWS32 - (_MISC + 9), H), jnp.float32)], axis=0)

    blk = jnp.arange(SL) // BL
    bd = (blk[:, None] == blk[None, :]).astype(jnp.float32)              # (SL, SL)
    slab64 = jnp.concatenate(
        [lp['w1'], params['fc_w'], bd, lp['b1'], params['fc_b'],
         jnp.zeros((_ROWS64 - (_BFC + 1), SL), jnp.float32)], axis=0)

    return {
        'pos_emb': params['pos_emb'],
        'trg_emb': params['trg_emb'],
        'slab32': jax.device_put(slab32),
        'slab64': jax.device_put(slab64),
    }


# ---------------------------------------------------------------------------
# JAX wrapper: embeddings, mask bias, single pallas_call.
# ---------------------------------------------------------------------------
def make_attn_bias(trg_ids):
    """(BL, NH*BL) additive attention bias, tiled over heads: 0 where the key
    is allowed, -1e10 where it is padded / acausal / from another batch row."""
    pad = (trg_ids != PAD_IDX)                               # (B, L)
    tril = jnp.tril(jnp.ones((L, L), dtype=bool))            # (Lq, Lk)
    allowed = pad[:, None, :] & tril[None]                   # (B, Lq, Lk)
    same_b = jnp.eye(B, dtype=bool)
    big = same_b[:, None, :, None] & allowed[:, :, None, :]  # (B, Lq, B, Lk)
    bias = jnp.where(big.reshape(BL, BL), 0.0, NEG_INF).astype(jnp.float32)
    return jnp.tile(bias, (1, NH))                           # (BL, SL)


@jax.jit
def decoder_forward(trg_ids, packed):
    pos_e = packed['pos_emb'][:L]                                     # (L, H)
    x = pos_e[None] + packed['trg_emb'][trg_ids] * jnp.sqrt(jnp.float32(H))
    x_flat = x.reshape(BL, H)            # fold (B, L) onto sublanes
    bias = make_attn_bias(trg_ids)

    logits = pl.pallas_call(
        decoder_kernel,
        out_shape=jax.ShapeDtypeStruct((BL, V), jnp.float32),
        in_specs=[pl.BlockSpec(memory_space=pltpu.MemorySpace.VMEM)] * 4,
        out_specs=pl.BlockSpec(memory_space=pltpu.MemorySpace.VMEM),
        cost_estimate=pl.CostEstimate(flops=_FLOPS, transcendentals=_TRANS,
                                      bytes_accessed=_BYTES),
    )(x_flat, bias, packed['slab32'], packed['slab64'])
    return logits.reshape(B, L, V)


# ---------------------------------------------------------------------------
# Pure-JAX reference (mirrors the PyTorch forward exactly) for verification
# ---------------------------------------------------------------------------
def _layer_norm_ref(x, g, b):
    mu = jnp.mean(x, axis=-1, keepdims=True)
    var = jnp.mean((x - mu) ** 2, axis=-1, keepdims=True)
    return (x - mu) * jax.lax.rsqrt(var + LN_EPS) * g + b


def ref_forward(trg_ids, params):
    pad = (trg_ids != PAD_IDX)
    tril = jnp.tril(jnp.ones((L, L), dtype=bool))
    mask = (pad[:, None, :] & tril[None]).astype(jnp.float32)   # (B, L, L)
    pos_e = params['pos_emb'][:L]
    x = pos_e[None] + params['trg_emb'][trg_ids] * jnp.sqrt(jnp.float32(H))

    def layer(xin, lp):
        q = xin @ lp['wq'] + lp['bq']
        k = xin @ lp['wk'] + lp['bk']
        v = xin @ lp['wv'] + lp['bv']
        qh = q.reshape(B, L, NH, HD).transpose(0, 2, 1, 3)
        kh = k.reshape(B, L, NH, HD).transpose(0, 2, 1, 3)
        vh = v.reshape(B, L, NH, HD).transpose(0, 2, 1, 3)
        e = jnp.einsum('bhqd,bhkd->bhqk', qh, kh) / jnp.sqrt(jnp.float32(HD))
        e = jnp.where(mask[:, None] > 0, e, NEG_INF)
        a = jax.nn.softmax(e, axis=-1)
        o = jnp.einsum('bhqk,bhkd->bhqd', a, vh).transpose(0, 2, 1, 3).reshape(B, L, H)
        o = o @ lp['wo'] + lp['bo']
        t = _layer_norm_ref(xin + o, lp['ln1g'], lp['ln1b'])
        ff = jnp.maximum(t @ lp['w1'] + lp['b1'], 0.0) @ lp['w2'] + lp['b2']
        return _layer_norm_ref(t + ff, lp['ln2g'], lp['ln2b'])

    trg = x
    for lp in params['layers']:
        trg = layer(x, lp)               # PyTorch: every layer sees `x`
    return trg @ params['fc_w'] + params['fc_b']


# ---------------------------------------------------------------------------
# Deterministic parameter init
# ---------------------------------------------------------------------------
def init_params(key):
    def lin(k, din, dout):
        k1, k2 = jax.random.split(k)
        return (jax.random.normal(k1, (din, dout), jnp.float32) * 0.05,
                jax.random.normal(k2, (1, dout), jnp.float32) * 0.05)

    keys = jax.random.split(key, 4 + N_LAYERS)
    params = {
        'pos_emb': jax.random.normal(keys[0], (MAX_LEN, H), jnp.float32) * 0.05,
        'trg_emb': jax.random.normal(keys[1], (V, H), jnp.float32) * 0.05,
    }
    params['fc_w'], params['fc_b'] = lin(keys[2], H, V)

    layers = []
    for i in range(N_LAYERS):
        lk = jax.random.split(keys[4 + i], 6)
        lp = {}
        lp['wq'], lp['bq'] = lin(lk[0], H, H)
        lp['wk'], lp['bk'] = lin(lk[1], H, H)
        lp['wv'], lp['bv'] = lin(lk[2], H, H)
        lp['wo'], lp['bo'] = lin(lk[3], H, H)
        lp['w1'], lp['b1'] = lin(lk[4], H, PF)
        lp['w2'], lp['b2'] = lin(lk[5], PF, H)
        lp['ln1g'] = jnp.ones((1, H), jnp.float32)
        lp['ln1b'] = jnp.zeros((1, H), jnp.float32)
        lp['ln2g'] = jnp.ones((1, H), jnp.float32)
        lp['ln2b'] = jnp.zeros((1, H), jnp.float32)
        layers.append(lp)
    params['layers'] = layers
    return params


# ---------------------------------------------------------------------------
if __name__ == "__main__":
    key = jax.random.PRNGKey(0)
    pkey, tkey = jax.random.split(key)
    params = init_params(pkey)
    packed = pack_params(params)         # one-time packing, outside the jit

    # target token ids, with trailing padding in the second sequence
    trg = jax.random.randint(tkey, (B, L), 1, V, dtype=jnp.int32)
    trg = trg.at[1, -2:].set(PAD_IDX)

    out = jax.block_until_ready(decoder_forward(trg, packed))
    ref = jax.block_until_ready(ref_forward(trg, params))

    # slightly relaxed tolerance: softmax uses pl.reciprocal(approx=True) (EUP)
    np.testing.assert_allclose(np.asarray(out), np.asarray(ref),
                               rtol=2e-3, atol=2e-3)
    assert out.shape == (B, L, V)

    # TODO(synk): beam_decode / greedy_decode are host-side Python search loops
    # over repeated forward calls; they have no in-kernel Pallas equivalent.
    print("KERNEL_OK")
</pallas_src>

<mosaic_0001>
module attributes {stable_mosaic.version = 11 : i64} {
  func.func @decoder_kernel(%arg0: memref<16x32xf32, #tpu.memory_space<vmem>>, %arg1: memref<16x64xf32, #tpu.memory_space<vmem>>, %arg2: memref<304x32xf32, #tpu.memory_space<vmem>>, %arg3: memref<136x64xf32, #tpu.memory_space<vmem>>, %arg4: memref<16x64xf32, #tpu.memory_space<vmem>>) attributes {dimension_semantics = [], scalar_prefetch = 0 : i64, scratch_operands = 0 : i64, tpu.core_type = #tpu.core_type<tc>} {
    %c0 = arith.constant 0 : index
    %c0_0 = arith.constant 0 : index
    %0 = vector.load %arg0[%c0, %c0_0] : memref<16x32xf32, #tpu.memory_space<vmem>>, vector<16x32xf32>
    %c0_1 = arith.constant 0 : index
    %c0_2 = arith.constant 0 : index
    %1 = vector.load %arg1[%c0_1, %c0_2] : memref<16x64xf32, #tpu.memory_space<vmem>>, vector<16x64xf32>
    %c0_3 = arith.constant 0 : index
    %c0_4 = arith.constant 0 : index
    %2 = vector.load %arg2[%c0_3, %c0_4] : memref<304x32xf32, #tpu.memory_space<vmem>>, vector<32x32xf32>
    %c32 = arith.constant 32 : index
    %c0_5 = arith.constant 0 : index
    %3 = vector.load %arg2[%c32, %c0_5] : memref<304x32xf32, #tpu.memory_space<vmem>>, vector<32x32xf32>
    %c64 = arith.constant 64 : index
    %c0_6 = arith.constant 0 : index
    %4 = vector.load %arg2[%c64, %c0_6] : memref<304x32xf32, #tpu.memory_space<vmem>>, vector<32x32xf32>
    %c96 = arith.constant 96 : index
    %c0_7 = arith.constant 0 : index
    %5 = vector.load %arg2[%c96, %c0_7] : memref<304x32xf32, #tpu.memory_space<vmem>>, vector<32x32xf32>
    %c128 = arith.constant 128 : index
    %c0_8 = arith.constant 0 : index
    %6 = vector.load %arg2[%c128, %c0_8] : memref<304x32xf32, #tpu.memory_space<vmem>>, vector<64x32xf32>
    %c192 = arith.constant 192 : index
    %c0_9 = arith.constant 0 : index
    %7 = vector.load %arg2[%c192, %c0_9] : memref<304x32xf32, #tpu.memory_space<vmem>>, vector<32x32xf32>
    %c224 = arith.constant 224 : index
    %c0_10 = arith.constant 0 : index
    %8 = vector.load %arg2[%c224, %c0_10] : memref<304x32xf32, #tpu.memory_space<vmem>>, vector<64x32xf32>
    %c288 = arith.constant 288 : index
    %c0_11 = arith.constant 0 : index
    %9 = vector.load %arg2[%c288, %c0_11] : memref<304x32xf32, #tpu.memory_space<vmem>>, vector<1x32xf32>
    %c289 = arith.constant 289 : index
    %c0_12 = arith.constant 0 : index
    %10 = vector.load %arg2[%c289, %c0_12] : memref<304x32xf32, #tpu.memory_space<vmem>>, vector<1x32xf32>
    %c290 = arith.constant 290 : index
    %c0_13 = arith.constant 0 : index
    %11 = vector.load %arg2[%c290, %c0_13] : memref<304x32xf32, #tpu.memory_space<vmem>>, vector<1x32xf32>
    %c291 = arith.constant 291 : index
    %c0_14 = arith.constant 0 : index
    %12 = vector.load %arg2[%c291, %c0_14] : memref<304x32xf32, #tpu.memory_space<vmem>>, vector<1x32xf32>
    %c292 = arith.constant 292 : index
    %c0_15 = arith.constant 0 : index
    %13 = vector.load %arg2[%c292, %c0_15] : memref<304x32xf32, #tpu.memory_space<vmem>>, vector<1x32xf32>
    %c293 = arith.constant 293 : index
    %c0_16 = arith.constant 0 : index
    %14 = vector.load %arg2[%c293, %c0_16] : memref<304x32xf32, #tpu.memory_space<vmem>>, vector<1x32xf32>
    %c294 = arith.constant 294 : index
    %c0_17 = arith.constant 0 : index
    %15 = vector.load %arg2[%c294, %c0_17] : memref<304x32xf32, #tpu.memory_space<vmem>>, vector<1x32xf32>
    %c295 = arith.constant 295 : index
    %c0_18 = arith.constant 0 : index
    %16 = vector.load %arg2[%c295, %c0_18] : memref<304x32xf32, #tpu.memory_space<vmem>>, vector<1x32xf32>
    %c296 = arith.constant 296 : index
    %c0_19 = arith.constant 0 : index
    %17 = vector.load %arg2[%c296, %c0_19] : memref<304x32xf32, #tpu.memory_space<vmem>>, vector<1x32xf32>
    %c0_20 = arith.constant 0 : index
    %c0_21 = arith.constant 0 : index
    %18 = vector.load %arg3[%c0_20, %c0_21] : memref<136x64xf32, #tpu.memory_space<vmem>>, vector<32x64xf32>
    %c32_22 = arith.constant 32 : index
    %c0_23 = arith.constant 0 : index
    %19 = vector.load %arg3[%c32_22, %c0_23] : memref<136x64xf32, #tpu.memory_space<vmem>>, vector<32x64xf32>
    %c64_24 = arith.constant 64 : index
    %c0_25 = arith.constant 0 : index
    %20 = vector.load %arg3[%c64_24, %c0_25] : memref<136x64xf32, #tpu.memory_space<vmem>>, vector<64x64xf32>
    %c128_26 = arith.constant 128 : index
    %c0_27 = arith.constant 0 : index
    %21 = vector.load %arg3[%c128_26, %c0_27] : memref<136x64xf32, #tpu.memory_space<vmem>>, vector<1x64xf32>
    %c129 = arith.constant 129 : index
    %c0_28 = arith.constant 0 : index
    %22 = vector.load %arg3[%c129, %c0_28] : memref<136x64xf32, #tpu.memory_space<vmem>>, vector<1x64xf32>
    %cst = arith.constant dense<0.000000e+00> : vector<16x32xf32>
    %23 = tpu.matmul %0, %2, %cst {dimension_numbers = #tpu.dot_dimension_numbers<[1], [0], [0], [1], [0, 0, 1, 1], [], []>} : vector<16x32xf32>, vector<32x32xf32>, vector<16x32xf32> -> vector<16x32xf32>
    %24 = vector.broadcast %9 : vector<1x32xf32> to vector<16x32xf32>
    %25 = arith.addf %23, %24 : vector<16x32xf32>
    %cst_29 = arith.constant dense<0.000000e+00> : vector<16x32xf32>
    %26 = tpu.matmul %0, %3, %cst_29 {dimension_numbers = #tpu.dot_dimension_numbers<[1], [0], [0], [1], [0, 0, 1, 1], [], []>} : vector<16x32xf32>, vector<32x32xf32>, vector<16x32xf32> -> vector<16x32xf32>
    %27 = vector.broadcast %10 : vector<1x32xf32> to vector<16x32xf32>
    %28 = arith.addf %26, %27 : vector<16x32xf32>
    %cst_30 = arith.constant dense<0.000000e+00> : vector<16x32xf32>
    %29 = tpu.matmul %0, %4, %cst_30 {dimension_numbers = #tpu.dot_dimension_numbers<[1], [0], [0], [1], [0, 0, 1, 1], [], []>} : vector<16x32xf32>, vector<32x32xf32>, vector<16x32xf32> -> vector<16x32xf32>
    %30 = vector.broadcast %11 : vector<1x32xf32> to vector<16x32xf32>
    %31 = arith.addf %29, %30 : vector<16x32xf32>
    %32 = tpu.concatenate %28, %28, %28, %28 in 0 : vector<16x32xf32>, vector<16x32xf32>, vector<16x32xf32>, vector<16x32xf32> -> vector<64x32xf32>
    %33 = arith.mulf %32, %8 : vector<64x32xf32>
    %34 = tpu.concatenate %31, %31, %31, %31 in 0 : vector<16x32xf32>, vector<16x32xf32>, vector<16x32xf32>, vector<16x32xf32> -> vector<64x32xf32>
    %35 = arith.mulf %34, %8 : vector<64x32xf32>
    %cst_31 = arith.constant dense<0.000000e+00> : vector<16x64xf32>
    %36 = tpu.matmul %25, %33, %cst_31 {dimension_numbers = #tpu.dot_dimension_numbers<[1], [1], [0], [0], [0, 0, 1, 0], [], []>} : vector<16x32xf32>, vector<64x32xf32>, vector<16x64xf32> -> vector<16x64xf32>
    %37 = arith.addf %36, %1 : vector<16x64xf32>
    %38 = math.exp %37 : vector<16x64xf32>
    %cst_32 = arith.constant dense<0.000000e+00> : vector<16x64xf32>
    %39 = tpu.matmul %38, %20, %cst_32 {dimension_numbers = #tpu.dot_dimension_numbers<[1], [0], [0], [1], [0, 0, 1, 1], [], []>} : vector<16x64xf32>, vector<64x64xf32>, vector<16x64xf32> -> vector<16x64xf32>
    %40 = tpu.reciprocal %39 {approx = true} : vector<16x64xf32> -> vector<16x64xf32>
    %41 = arith.mulf %38, %40 : vector<16x64xf32>
    %cst_33 = arith.constant dense<0.000000e+00> : vector<16x32xf32>
    %42 = tpu.matmul %41, %35, %cst_33 {dimension_numbers = #tpu.dot_dimension_numbers<[1], [0], [0], [1], [0, 0, 1, 1], [], []>} : vector<16x64xf32>, vector<64x32xf32>, vector<16x32xf32> -> vector<16x32xf32>
    %cst_34 = arith.constant dense<0.000000e+00> : vector<16x32xf32>
    %43 = tpu.matmul %42, %5, %cst_34 {dimension_numbers = #tpu.dot_dimension_numbers<[1], [0], [0], [1], [0, 0, 1, 1], [], []>} : vector<16x32xf32>, vector<32x32xf32>, vector<16x32xf32> -> vector<16x32xf32>
    %44 = vector.broadcast %12 : vector<1x32xf32> to vector<16x32xf32>
    %45 = arith.addf %43, %44 : vector<16x32xf32>
    %46 = arith.addf %0, %45 : vector<16x32xf32>
    %cst_35 = arith.constant dense<0.000000e+00> : vector<16x32xf32>
    %47 = tpu.matmul %46, %7, %cst_35 {dimension_numbers = #tpu.dot_dimension_numbers<[1], [0], [0], [1], [0, 0, 1, 1], [], []>} : vector<16x32xf32>, vector<32x32xf32>, vector<16x32xf32> -> vector<16x32xf32>
    %48 = arith.mulf %46, %46 : vector<16x32xf32>
    %cst_36 = arith.constant dense<0.000000e+00> : vector<16x32xf32>
    %49 = tpu.matmul %48, %7, %cst_36 {dimension_numbers = #tpu.dot_dimension_numbers<[1], [0], [0], [1], [0, 0, 1, 1], [], []>} : vector<16x32xf32>, vector<32x32xf32>, vector<16x32xf32> -> vector<16x32xf32>
    %50 = arith.mulf %47, %47 : vector<16x32xf32>
    %51 = arith.subf %49, %50 : vector<16x32xf32>
    %cst_37 = arith.constant 0.000000e+00 : f32
    %52 = vector.broadcast %cst_37 : f32 to vector<16x32xf32>
    %53 = arith.maximumf %51, %52 : vector<16x32xf32>
    %54 = arith.subf %46, %47 : vector<16x32xf32>
    %cst_38 = arith.constant 9.99999974E-6 : f32
    %55 = vector.broadcast %cst_38 : f32 to vector<16x32xf32>
    %56 = arith.addf %53, %55 : vector<16x32xf32>
    %57 = math.rsqrt %56 : vector<16x32xf32>
    %58 = arith.mulf %54, %57 : vector<16x32xf32>
    %59 = vector.broadcast %13 : vector<1x32xf32> to vector<16x32xf32>
    %60 = arith.mulf %58, %59 : vector<16x32xf32>
    %61 = vector.broadcast %14 : vector<1x32xf32> to vector<16x32xf32>
    %62 = arith.addf %60, %61 : vector<16x32xf32>
    %cst_39 = arith.constant dense<0.000000e+00> : vector<16x64xf32>
    %63 = tpu.matmul %62, %18, %cst_39 {dimension_numbers = #tpu.dot_dimension_numbers<[1], [0], [0], [1], [0, 0, 1, 1], [], []>} : vector<16x32xf32>, vector<32x64xf32>, vector<16x64xf32> -> vector<16x64xf32>
    %64 = vector.broadcast %21 : vector<1x64xf32> to vector<16x64xf32>
    %65 = arith.addf %63, %64 : vector<16x64xf32>
    %cst_40 = arith.constant 0.000000e+00 : f32
    %66 = vector.broadcast %cst_40 : f32 to vector<16x64xf32>
    %67 = arith.maximumf %65, %66 : vector<16x64xf32>
    %cst_41 = arith.constant dense<0.000000e+00> : vector<16x32xf32>
    %68 = tpu.matmul %67, %6, %cst_41 {dimension_numbers = #tpu.dot_dimension_numbers<[1], [0], [0], [1], [0, 0, 1, 1], [], []>} : vector<16x64xf32>, vector<64x32xf32>, vector<16x32xf32> -> vector<16x32xf32>
    %69 = vector.broadcast %15 : vector<1x32xf32> to vector<16x32xf32>
    %70 = arith.addf %68, %69 : vector<16x32xf32>
    %71 = arith.addf %62, %70 : vector<16x32xf32>
    %cst_42 = arith.constant dense<0.000000e+00> : vector<16x32xf32>
    %72 = tpu.matmul %71, %7, %cst_42 {dimension_numbers = #tpu.dot_dimension_numbers<[1], [0], [0], [1], [0, 0, 1, 1], [], []>} : vector<16x32xf32>, vector<32x32xf32>, vector<16x32xf32> -> vector<16x32xf32>
    %73 = arith.mulf %71, %71 : vector<16x32xf32>
    %cst_43 = arith.constant dense<0.000000e+00> : vector<16x32xf32>
    %74 = tpu.matmul %73, %7, %cst_43 {dimension_numbers = #tpu.dot_dimension_numbers<[1], [0], [0], [1], [0, 0, 1, 1], [], []>} : vector<16x32xf32>, vector<32x32xf32>, vector<16x32xf32> -> vector<16x32xf32>
    %75 = arith.mulf %72, %72 : vector<16x32xf32>
    %76 = arith.subf %74, %75 : vector<16x32xf32>
    %cst_44 = arith.constant 0.000000e+00 : f32
    %77 = vector.broadcast %cst_44 : f32 to vector<16x32xf32>
    %78 = arith.maximumf %76, %77 : vector<16x32xf32>
    %79 = arith.subf %71, %72 : vector<16x32xf32>
    %cst_45 = arith.constant 9.99999974E-6 : f32
    %80 = vector.broadcast %cst_45 : f32 to vector<16x32xf32>
    %81 = arith.addf %78, %80 : vector<16x32xf32>
    %82 = math.rsqrt %81 : vector<16x32xf32>
    %83 = arith.mulf %79, %82 : vector<16x32xf32>
    %84 = vector.broadcast %16 : vector<1x32xf32> to vector<16x32xf32>
    %85 = arith.mulf %83, %84 : vector<16x32xf32>
    %86 = vector.broadcast %17 : vector<1x32xf32> to vector<16x32xf32>
    %87 = arith.addf %85, %86 : vector<16x32xf32>
    %cst_46 = arith.constant dense<0.000000e+00> : vector<16x64xf32>
    %88 = tpu.matmul %87, %19, %cst_46 {dimension_numbers = #tpu.dot_dimension_numbers<[1], [0], [0], [1], [0, 0, 1, 1], [], []>} : vector<16x32xf32>, vector<32x64xf32>, vector<16x64xf32> -> vector<16x64xf32>
    %89 = vector.broadcast %22 : vector<1x64xf32> to vector<16x64xf32>
    %90 = arith.addf %88, %89 : vector<16x64xf32>
    %c0_47 = arith.constant 0 : index
    %c0_48 = arith.constant 0 : index
    %91 = vector.load %arg4[%c0_47, %c0_48] : memref<16x64xf32, #tpu.memory_space<vmem>>, vector<16x64xf32>
    tpu.vector_store %arg4[%c0_47, %c0_48], %90 {strides = array<i32>} : memref<16x64xf32, #tpu.memory_space<vmem>>, vector<16x64xf32>,
    return
  }
}

</mosaic_0001>

<llo_original>
// kernel: tile.9
$region0: #{tile.9}
  %s0 = inlined_call_operand.vmem [shape: f32[16,4,16], index: 0, kind: input, shape index: {}]
  %s1 = inlined_call_operand.vmem [shape: f32[16,64], index: 1, kind: output, shape index: {}]
  $region1: #{tile.9} parent=0
    #allocation0 [shape = 'u8[65536]{0}', space=vmem, size = 0x10000, scoped, tag = 'scoped mem for input reshape']
    %s3 = ssub.s32 16, 1
    %s4 = scalar_lea.vmem %s0, 60
    %v5 = vld [vmem:[%s4] sm:%s3]
    %s6 = scalar_lea.vmem [#allocation0], 120
    %7 = vst [vmem:[%s6] sm:%s3] %v5
    %s8 = scalar_lea.vmem %s0, 56
    %v9 = vld [vmem:[%s8] sm:%s3]
    %s10 = scalar_lea.vmem [#allocation0], 112
    %11 = vst [vmem:[%s10] sm:%s3] %v9
    %s12 = scalar_lea.vmem %s0, 52
    %v13 = vld [vmem:[%s12] sm:%s3]
    %s14 = scalar_lea.vmem [#allocation0], 104
    %15 = vst [vmem:[%s14] sm:%s3] %v13
    %s16 = scalar_lea.vmem %s0, 48
    %v17 = vld [vmem:[%s16] sm:%s3]
    %s18 = scalar_lea.vmem [#allocation0], 96
    %19 = vst [vmem:[%s18] sm:%s3] %v17
    %s20 = scalar_lea.vmem %s0, 44
    %v21 = vld [vmem:[%s20] sm:%s3]
    %s22 = scalar_lea.vmem [#allocation0], 88
    %23 = vst [vmem:[%s22] sm:%s3] %v21
    %s24 = scalar_lea.vmem %s0, 40
    %v25 = vld [vmem:[%s24] sm:%s3]
    %s26 = scalar_lea.vmem [#allocation0], 80
    %27 = vst [vmem:[%s26] sm:%s3] %v25
    %s28 = scalar_lea.vmem %s0, 36
    %v29 = vld [vmem:[%s28] sm:%s3]
    %s30 = scalar_lea.vmem [#allocation0], 72
    %31 = vst [vmem:[%s30] sm:%s3] %v29
    %s32 = scalar_lea.vmem %s0, 32
    %v33 = vld [vmem:[%s32] sm:%s3]
    %s34 = scalar_lea.vmem [#allocation0], 64
    %35 = vst [vmem:[%s34] sm:%s3] %v33
    %s36 = scalar_lea.vmem %s0, 28
    %v37 = vld [vmem:[%s36] sm:%s3]
    %s38 = scalar_lea.vmem [#allocation0], 56
    %39 = vst [vmem:[%s38] sm:%s3] %v37
    %s40 = scalar_lea.vmem %s0, 24
    %v41 = vld [vmem:[%s40] sm:%s3]
    %s42 = scalar_lea.vmem [#allocation0], 48
    %43 = vst [vmem:[%s42] sm:%s3] %v41
    %s44 = scalar_lea.vmem %s0, 20
    %v45 = vld [vmem:[%s44] sm:%s3]
    %s46 = scalar_lea.vmem [#allocation0], 40
    %47 = vst [vmem:[%s46] sm:%s3] %v45
    %s48 = scalar_lea.vmem %s0, 16
    %v49 = vld [vmem:[%s48] sm:%s3]
    %s50 = scalar_lea.vmem [#allocation0], 32
    %51 = vst [vmem:[%s50] sm:%s3] %v49
    %s52 = scalar_lea.vmem %s0, 12
    %v53 = vld [vmem:[%s52] sm:%s3]
    %s54 = scalar_lea.vmem [#allocation0], 24
    %55 = vst [vmem:[%s54] sm:%s3] %v53
    %s56 = scalar_lea.vmem %s0, 8
    %v57 = vld [vmem:[%s56] sm:%s3]
    %s58 = scalar_lea.vmem [#allocation0], 16
    %59 = vst [vmem:[%s58] sm:%s3] %v57
    %s60 = scalar_lea.vmem %s0, 4
    %v61 = vld [vmem:[%s60] sm:%s3]
    %s62 = scalar_lea.vmem [#allocation0], 8
    %63 = vst [vmem:[%s62] sm:%s3] %v61
    %v64 = vld [vmem:[%s0] sm:%s3]
    %65 = vst [vmem:[#allocation0] sm:%s3] %v64
    %v66 = vld [vmem:[#allocation0] ss:$8 sm:$0xf]
    %v67 = vld [vmem:[#allocation0] ss:$8 sm:$0xf0]
    %vm68 = vcmask 1047556
    %v69 = vsel %vm68, %v67, %v66
    %vm70 = vcmask 130048
    %71 = vst.msk [vmem:[%s1] sm:$0xff] %vm70, %v69
    %s72 = scalar_lea.vmem [#allocation0], 64
    %v73 = vld [vmem:[%s72] ss:$8 sm:$0xf]
    %s74 = scalar_lea.vmem [#allocation0], 64
    %v75 = vld [vmem:[%s74] ss:$8 sm:$0xf0]
    %vm76 = vcmask 1047556
    %v77 = vsel %vm76, %v75, %v73
    %vm78 = vcmask 130048
    %s79 = scalar_lea.vmem %s1, 8
    %80 = vst.msk [vmem:[%s79] sm:$0xff] %vm78, %v77
    %s81 = scalar_lea.vmem [#allocation0], 3
    %v82 = vld [vmem:[%s81] ss:$8 sm:$0xf]
    %s83 = scalar_lea.vmem [#allocation0], 3
    %v84 = vld [vmem:[%s83] ss:$8 sm:$0xf0]
    %vm85 = vcmask 1047556
    %v86 = vsel %vm85, %v84, %v82
    %87 = vrot.lane.b32.xlu0 %v86, 48
    %v88 = vpop.permute.xlu0 %87
    %vm89 = vcmask 523648
    %90 = vst.msk [vmem:[%s1] sm:$0xff] %vm89, %v88
    %s91 = scalar_lea.vmem [#allocation0], 67
    %v92 = vld [vmem:[%s91] ss:$8 sm:$0xf]
    %s93 = scalar_lea.vmem [#allocation0], 67
    %v94 = vld [vmem:[%s93] ss:$8 sm:$0xf0]
    %vm95 = vcmask 1047556
    %v96 = vsel %vm95, %v94, %v92
    %97 = vrot.lane.b32.xlu0 %v96, 48
    %v98 = vpop.permute.xlu0 %97
    %vm99 = vcmask 523648
    %s100 = scalar_lea.vmem %s1, 8
    %101 = vst.msk [vmem:[%s100] sm:$0xff] %vm99, %v98
    %s102 = scalar_lea.vmem [#allocation0], 2
    %v103 = vld [vmem:[%s102] ss:$8 sm:$0xf]
    %s104 = scalar_lea.vmem [#allocation0], 2
    %v105 = vld [vmem:[%s104] ss:$8 sm:$0xf0]
    %vm106 = vcmask 1047556
    %v107 = vsel %vm106, %v105, %v103
    %108 = vrot.lane.b32.xlu0 %v107, 32
    %v109 = vpop.permute.xlu0 %108
    %vm110 = vcmask 392448
    %111 = vst.msk [vmem:[%s1] sm:$0xff] %vm110, %v109
    %s112 = scalar_lea.vmem [#allocation0], 66
    %v113 = vld [vmem:[%s112] ss:$8 sm:$0xf]
    %s114 = scalar_lea.vmem [#allocation0], 66
    %v115 = vld [vmem:[%s114] ss:$8 sm:$0xf0]
    %vm116 = vcmask 1047556
    %v117 = vsel %vm116, %v115, %v113
    %118 = vrot.lane.b32.xlu0 %v117, 32
    %v119 = vpop.permute.xlu0 %118
    %vm120 = vcmask 392448
    %s121 = scalar_lea.vmem %s1, 8
    %122 = vst.msk [vmem:[%s121] sm:$0xff] %vm120, %v119
    %s123 = scalar_lea.vmem [#allocation0], 1
    %v124 = vld [vmem:[%s123] ss:$8 sm:$0xf]
    %s125 = scalar_lea.vmem [#allocation0], 1
    %v126 = vld [vmem:[%s125] ss:$8 sm:$0xf0]
    %vm127 = vcmask 1047556
    %v128 = vsel %vm127, %v126, %v124
    %129 = vrot.lane.b32.xlu0 %v128, 16
    %v130 = vpop.permute.xlu0 %129
    %vm131 = vcmask 261248
    %132 = vst.msk [vmem:[%s1] sm:$0xff] %vm131, %v130
    %s133 = scalar_lea.vmem [#allocation0], 65
    %v134 = vld [vmem:[%s133] ss:$8 sm:$0xf]
    %s135 = scalar_lea.vmem [#allocation0], 65
    %v136 = vld [vmem:[%s135] ss:$8 sm:$0xf0]
    %vm137 = vcmask 1047556
    %v138 = vsel %vm137, %v136, %v134
    %139 = vrot.lane.b32.xlu0 %v138, 16
    %v140 = vpop.permute.xlu0 %139
    %vm141 = vcmask 261248
    %s142 = scalar_lea.vmem %s1, 8
    %143 = vst.msk [vmem:[%s142] sm:$0xff] %vm141, %v140

// kernel: decoder_forward.1
$region0: #{decoder_forward.1}
  #allocation0 [shape = 'u32[]', space=smem, size = 0x4, offset = 0x4, fixed_abs, tag = 'smem constant byte address 0x4 - core index']
  #allocation1 [shape = 'u32[72,128]{1,0:T(1,128)}', space=vmem, size = 0x9000, scoped, tag = 'internal scratch']
  %s0 = inlined_call_operand.vmem [shape: f32[16,32], index: 0, kind: input, shape index: {}]
  %s1 = inlined_call_operand.vmem [shape: f32[16,64], index: 1, kind: input, shape index: {}]
  %s2 = inlined_call_operand.vmem [shape: f32[304,32], index: 2, kind: input, shape index: {}]
  %s3 = inlined_call_operand.vmem [shape: f32[136,64], index: 3, kind: input, shape index: {}]
  %s4 = inlined_call_operand.hbm [shape: f32[16,64], index: 4, kind: output, shape index: {}]
  %s5 = sld [smem:[#allocation0]]
  $region26: #{decoder_forward.1} parent=0
    _
  %s7 = ssub.s32 1, %s5
  %s8 = scalar_select 0, %s7, %s5
  $region1: #{decoder_forward.1} parent=0
    #allocation2 [shape = 'u8[8192]{0}', space=vmem, size = 0x2000, scoped, tag = 'output window, operand 0, single buffered']
    #allocation3 [shape = 's32[1]{0}', space=sflag, size = 0x4, scoped, tag = 'scoped memory for decoder_forward.1']
    %9 = vsyncpa [#allocation3], 0
    // Predicated region
    $region2: #{decoder_forward.1} parent=1 // pred_check
      _
    $region3: #{decoder_forward.1} parent=1 // pred_check_branch
      %11 = sbr.rel (0) target = $region5
    $region4: #{decoder_forward.1} parent=1 // pred_region
      _
    $region5: #{decoder_forward.1} parent=1 // pred_fallthru
      _
    // Predicated region
    $region6: #{decoder_forward.1} parent=1 // pred_check
      _
    $region7: #{decoder_forward.1} parent=1 // pred_check_branch
      %13 = sbr.rel (0) target = $region9
    $region8: #{decoder_forward.1} parent=1 // pred_region
      _
    $region9: #{decoder_forward.1} parent=1 // pred_fallthru
      _
    // Predicated region
    $region10: #{decoder_forward.1} parent=1 // pred_check
      _
    $region11: #{decoder_forward.1} parent=1 // pred_check_branch
      %15 = sbr.rel (0) target = $region13
    $region12: #{decoder_forward.1} parent=1 // pred_region
      _
    $region13: #{decoder_forward.1} parent=1 // pred_fallthru
      _
    // Predicated region
    $region14: #{decoder_forward.1} parent=1 // pred_check
      _
    $region15: #{decoder_forward.1} parent=1 // pred_check_branch
      %17 = sbr.rel (0) target = $region17
    $region16: #{decoder_forward.1} parent=1 // pred_region
      _
    $region17: #{decoder_forward.1} parent=1 // pred_fallthru
      _
    %v18 = vld [vmem:[%s0] sm:$0xff]
    %v19 = vld [vmem:[%s0 + $0x8] sm:$0xff]
    %v20 = vld [vmem:[%s1] sm:$0xff]
    %v21 = vld [vmem:[%s1 + $0x8] sm:$0xff]
    %v22 = vld [vmem:[%s2] sm:$0xff]
    %v23 = vld [vmem:[%s2 + $0x8] sm:$0xff]
    %v24 = vld [vmem:[%s2 + $0x10] sm:$0xff]
    %v25 = vld [vmem:[%s2 + $0x18] sm:$0xff]
    %v26 = vld [vmem:[%s2 + $0x20] sm:$0xff]
    %v27 = vld [vmem:[%s2 + $0x28] sm:$0xff]
    %v28 = vld [vmem:[%s2 + $0x30] sm:$0xff]
    %v29 = vld [vmem:[%s2 + $0x38] sm:$0xff]
    %v30 = vld [vmem:[%s2 + $0x40] sm:$0xff]
    %v31 = vld [vmem:[%s2 + $0x48] sm:$0xff]
    %v32 = vld [vmem:[%s2 + $0x50] sm:$0xff]
    %v33 = vld [vmem:[%s2 + $0x58] sm:$0xff]
    %v34 = vld [vmem:[%s2 + $0x60] sm:$0xff]
    %v35 = vld [vmem:[%s2 + $0x68] sm:$0xff]
    %v36 = vld [vmem:[%s2 + $0x70] sm:$0xff]
    %v37 = vld [vmem:[%s2 + $0x78] sm:$0xff]
    %v38 = vld [vmem:[%s2 + $0x80] sm:$0xff]
    %v39 = vld [vmem:[%s2 + $0x88] sm:$0xff]
    %v40 = vld [vmem:[%s2 + $0x90] sm:$0xff]
    %v41 = vld [vmem:[%s2 + $0x98] sm:$0xff]
    %v42 = vld [vmem:[%s2 + $0xa0] sm:$0xff]
    %v43 = vld [vmem:[%s2 + $0xa8] sm:$0xff]
    %v44 = vld [vmem:[%s2 + $0xb0] sm:$0xff]
    %v45 = vld [vmem:[%s2 + $0xb8] sm:$0xff]
    %v46 = vld [vmem:[%s2 + $0xc0] sm:$0xff]
    %v47 = vld [vmem:[%s2 + $0xc8] sm:$0xff]
    %v48 = vld [vmem:[%s2 + $0xd0] sm:$0xff]
    %v49 = vld [vmem:[%s2 + $0xd8] sm:$0xff]
    %v50 = vld [vmem:[%s2 + $0xe0] sm:$0xff]
    %v51 = vld [vmem:[%s2 + $0xe8] sm:$0xff]
    %v52 = vld [vmem:[%s2 + $0xf0] sm:$0xff]
    %v53 = vld [vmem:[%s2 + $0xf8] sm:$0xff]
    %v54 = vld [vmem:[%s2 + $0x100] sm:$0xff]
    %v55 = vld [vmem:[%s2 + $0x108] sm:$0xff]
    %v56 = vld [vmem:[%s2 + $0x110] sm:$0xff]
    %v57 = vld [vmem:[%s2 + $0x118] sm:$0xff]
    %v58 = vld [vmem:[%s2 + $0x120] sm:$0x1]
    %v59 = vld [vmem:[%s2 + $0x121] sm:$0x1]
    %v60 = vld [vmem:[%s2 + $0x122] sm:$0x1]
    %v61 = vld [vmem:[%s2 + $0x123] sm:$0x1]
    %v62 = vld [vmem:[%s2 + $0x124] sm:$0x1]
    %v63 = vld [vmem:[%s2 + $0x125] sm:$0x1]
    %v64 = vld [vmem:[%s2 + $0x126] sm:$0x1]
    %v65 = vld [vmem:[%s2 + $0x127] sm:$0x1]
    %v66 = vld [vmem:[%s2 + $0x128] sm:$0x1]
    %v67 = vld [vmem:[%s3] sm:$0xff]
    %v68 = vld [vmem:[%s3 + $0x8] sm:$0xff]
    %v69 = vld [vmem:[%s3 + $0x10] sm:$0xff]
    %v70 = vld [vmem:[%s3 + $0x18] sm:$0xff]
    %v71 = vld [vmem:[%s3 + $0x20] sm:$0xff]
    %v72 = vld [vmem:[%s3 + $0x28] sm:$0xff]
    %v73 = vld [vmem:[%s3 + $0x30] sm:$0xff]
    %v74 = vld [vmem:[%s3 + $0x38] sm:$0xff]
    %v75 = vld [vmem:[%s3 + $0x40] sm:$0xff]
    %v76 = vld [vmem:[%s3 + $0x48] sm:$0xff]
    %v77 = vld [vmem:[%s3 + $0x50] sm:$0xff]
    %v78 = vld [vmem:[%s3 + $0x58] sm:$0xff]
    %v79 = vld [vmem:[%s3 + $0x60] sm:$0xff]
    %v80 = vld [vmem:[%s3 + $0x68] sm:$0xff]
    %v81 = vld [vmem:[%s3 + $0x70] sm:$0xff]
    %v82 = vld [vmem:[%s3 + $0x78] sm:$0xff]
    %v83 = vld [vmem:[%s3 + $0x80] sm:$0x1]
    %v84 = vld [vmem:[%s3 + $0x81] sm:$0x1]
    %v85 = vperm.slane %v58, 0
    %vm86 = vcmask 261120
    %v88 = vsel %vm86, %v18, 0
    %v91 = vsel %vm86, %v19, 0
    %93 = vmatpush.msra.mxu0 0.0
    %94 = vmatpush.msra.mxu0 0.0
    %95 = vmatpush.msra.mxu0 0.0
    %96 = vmatpush.msra.mxu0 0.0
    %97 = vmatpush.msra.mxu0 0.0
    %98 = vmatpush.msra.mxu0 0.0
    %99 = vmatpush.msra.mxu0 0.0
    %100 = vmatpush.msra.mxu0 0.0
    %101 = vmatpush.msra.mxu0 0.0
    %102 = vmatpush.msra.mxu0 0.0
    %103 = vmatpush.msra.mxu0 0.0
    %104 = vmatpush.msra.mxu0 0.0
    %105 = vmatpush.msra.mxu0 %v25
    %106 = vmatpush.msra.mxu0 %v24
    %107 = vmatpush.msra.mxu0 %v23
    %108 = vmatpush.msra.mxu0 %v22
    %109 = vmatmul.f32.gmra.mxu0 %v88
    %v110 = vpop.f32.mrf.mxu0
    %v111 = vadd.f32 %v85, %v110
    %112 = vmatmul.f32.gmra.mxu0 %v91
    %v113 = vpop.f32.mrf.mxu0
    %v114 = vadd.f32 %v85, %v113
    %115 = vdwg.mxu0
    %v116 = vperm.slane %v59, 0
    %117 = vmatpush.msra.mxu0 0.0
    %118 = vmatpush.msra.mxu0 0.0
    %119 = vmatpush.msra.mxu0 0.0
    %120 = vmatpush.msra.mxu0 0.0
    %121 = vmatpush.msra.mxu0 0.0
    %122 = vmatpush.msra.mxu0 0.0
    %123 = vmatpush.msra.mxu0 0.0
    %124 = vmatpush.msra.mxu0 0.0
    %125 = vmatpush.msra.mxu0 0.0
    %126 = vmatpush.msra.mxu0 0.0
    %127 = vmatpush.msra.mxu0 0.0
    %128 = vmatpush.msra.mxu0 0.0
    %129 = vmatpush.msra.mxu0 %v29
    %130 = vmatpush.msra.mxu0 %v28
    %131 = vmatpush.msra.mxu0 %v27
    %132 = vmatpush.msra.mxu0 %v26
    %133 = vmatmul.f32.gmra.mxu0 %v88
    %v134 = vpop.f32.mrf.mxu0
    %v135 = vadd.f32 %v116, %v134
    %136 = vmatmul.f32.gmra.mxu0 %v91
    %v137 = vpop.f32.mrf.mxu0
    %v138 = vadd.f32 %v116, %v137
    %139 = vdwg.mxu0
    %v140 = vperm.slane %v60, 0
    %141 = vmatpush.msra.mxu0 0.0
    %142 = vmatpush.msra.mxu0 0.0
    %143 = vmatpush.msra.mxu0 0.0
    %144 = vmatpush.msra.mxu0 0.0
    %145 = vmatpush.msra.mxu0 0.0
    %146 = vmatpush.msra.mxu0 0.0
    %147 = vmatpush.msra.mxu0 0.0
    %148 = vmatpush.msra.mxu0 0.0
    %149 = vmatpush.msra.mxu0 0.0
    %150 = vmatpush.msra.mxu0 0.0
    %151 = vmatpush.msra.mxu0 0.0
    %152 = vmatpush.msra.mxu0 0.0
    %153 = vmatpush.msra.mxu0 %v33
    %154 = vmatpush.msra.mxu0 %v32
    %155 = vmatpush.msra.mxu0 %v31
    %156 = vmatpush.msra.mxu0 %v30
    %157 = vmatmul.f32.gmra.mxu0 %v88
    %v158 = vpop.f32.mrf.mxu0
    %v159 = vadd.f32 %v140, %v158
    %160 = vmatmul.f32.gmra.mxu0 %v91
    %v161 = vpop.f32.mrf.mxu0
    %v162 = vadd.f32 %v140, %v161
    %163 = vdwg.mxu0
    %v164 = vmul.f32 %v135, %v50
    %v165 = vmul.f32 %v138, %v51
    %v166 = vmul.f32 %v135, %v52
    %v167 = vmul.f32 %v138, %v53
    %v168 = vmul.f32 %v135, %v54
    %v169 = vmul.f32 %v138, %v55
    %v170 = vmul.f32 %v135, %v56
    %v171 = vmul.f32 %v138, %v57
    %v172 = vmul.f32 %v159, %v50
    %v173 = vmul.f32 %v162, %v51
    %v174 = vmul.f32 %v159, %v52
    %v175 = vmul.f32 %v162, %v53
    %v176 = vmul.f32 %v159, %v54
    %v177 = vmul.f32 %v162, %v55
    %v178 = vmul.f32 %v159, %v56
    %v179 = vmul.f32 %v162, %v57
    %v181 = vsel %vm86, %v111, 0
    %v184 = vsel %vm86, %v114, 0
    %v187 = vsel %vm86, %v164, 0
    %v190 = vsel %vm86, %v165, 0
    %v193 = vsel %vm86, %v166, 0
    %v196 = vsel %vm86, %v167, 0
    %v199 = vsel %vm86, %v168, 0
    %v202 = vsel %vm86, %v169, 0
    %v205 = vsel %vm86, %v170, 0
    %v208 = vsel %vm86, %v171, 0
    %210 = vmatpush.xpose.msra.mxu0 0.0
    %211 = vmatpush.xpose.msra.mxu0 0.0
    %212 = vmatpush.xpose.msra.mxu0 0.0
    %213 = vmatpush.xpose.msra.mxu0 0.0
    %214 = vmatpush.xpose.msra.mxu0 0.0
    %215 = vmatpush.xpose.msra.mxu0 0.0
    %216 = vmatpush.xpose.msra.mxu0 0.0
    %217 = vmatpush.xpose.msra.mxu0 0.0
    %218 = vmatpush.xpose.msra.mxu0 %v208
    %219 = vmatpush.xpose.msra.mxu0 %v205
    %220 = vmatpush.xpose.msra.mxu0 %v202
    %221 = vmatpush.xpose.msra.mxu0 %v199
    %222 = vmatpush.xpose.msra.mxu0 %v196
    %223 = vmatpush.xpose.msra.mxu0 %v193
    %224 = vmatpush.xpose.msra.mxu0 %v190
    %225 = vmatpush.xpose.msra.mxu0 %v187
    %226 = vmatmul.f32.gmra.mxu0 %v181
    %v227 = vpop.f32.mrf.mxu0
    %v228 = vadd.f32 %v20, %v227
    %229 = vmatmul.f32.gmra.mxu0 %v184
    %v230 = vpop.f32.mrf.mxu0
    %v231 = vadd.f32 %v21, %v230
    %232 = vdwg.mxu0
    %v233 = vmul.f32 %v228, 1.442695
    %v234 = vpow.pop %v233
    %v235 = vmul.f32 %v231, 1.442695
    %v236 = vpow.pop %v235
    %vm237 = vcmask 523264
    %v239 = vsel %vm237, %v234, 0
    %v242 = vsel %vm237, %v236, 0
    %244 = vmatpush.msra.mxu0 0.0
    %245 = vmatpush.msra.mxu0 0.0
    %246 = vmatpush.msra.mxu0 0.0
    %247 = vmatpush.msra.mxu0 0.0
    %248 = vmatpush.msra.mxu0 0.0
    %249 = vmatpush.msra.mxu0 0.0
    %250 = vmatpush.msra.mxu0 0.0
    %251 = vmatpush.msra.mxu0 0.0
    %252 = vmatpush.msra.mxu0 %v82
    %253 = vmatpush.msra.mxu0 %v81
    %254 = vmatpush.msra.mxu0 %v80
    %255 = vmatpush.msra.mxu0 %v79
    %256 = vmatpush.msra.mxu0 %v78
    %257 = vmatpush.msra.mxu0 %v77
    %258 = vmatpush.msra.mxu0 %v76
    %259 = vmatpush.msra.mxu0 %v75
    %260 = vmatmul.f32.gmra.mxu0 %v239
    %v261 = vpop.f32.mrf.mxu0
    %v262 = vadd.f32 0.0, %v261
    %263 = vmatmul.f32.gmra.mxu0 %v242
    %v264 = vpop.f32.mrf.mxu0
    %v265 = vadd.f32 0.0, %v264
    %266 = vdwg.mxu0
    %v267 = vrcp.pop %v262
    %v268 = vrcp.pop %v265
    %v269 = vmul.f32 %v234, %v267
    %v270 = vmul.f32 %v236, %v268
    %v272 = vsel %vm237, %v269, 0
    %v275 = vsel %vm237, %v270, 0
    %277 = vmatpush.msra.mxu0 0.0
    %278 = vmatpush.msra.mxu0 0.0
    %279 = vmatpush.msra.mxu0 0.0
    %280 = vmatpush.msra.mxu0 0.0
    %281 = vmatpush.msra.mxu0 0.0
    %282 = vmatpush.msra.mxu0 0.0
    %283 = vmatpush.msra.mxu0 0.0
    %284 = vmatpush.msra.mxu0 0.0
    %285 = vmatpush.msra.mxu0 %v179
    %286 = vmatpush.msra.mxu0 %v178
    %287 = vmatpush.msra.mxu0 %v177
    %288 = vmatpush.msra.mxu0 %v176
    %289 = vmatpush.msra.mxu0 %v175
    %290 = vmatpush.msra.mxu0 %v174
    %291 = vmatpush.msra.mxu0 %v173
    %292 = vmatpush.msra.mxu0 %v172
    %293 = vmatmul.f32.gmra.mxu0 %v272
    %v294 = vpop.f32.mrf.mxu0
    %v295 = vadd.f32 0.0, %v294
    %296 = vmatmul.f32.gmra.mxu0 %v275
    %v297 = vpop.f32.mrf.mxu0
    %v298 = vadd.f32 0.0, %v297
    %299 = vdwg.mxu0
    %v300 = vperm.slane %v61, 0
    %v302 = vsel %vm86, %v295, 0
    %v305 = vsel %vm86, %v298, 0
    %307 = vmatpush.msra.mxu0 0.0
    %308 = vmatpush.msra.mxu0 0.0
    %309 = vmatpush.msra.mxu0 0.0
    %310 = vmatpush.msra.mxu0 0.0
    %311 = vmatpush.msra.mxu0 0.0
    %312 = vmatpush.msra.mxu0 0.0
    %313 = vmatpush.msra.mxu0 0.0
    %314 = vmatpush.msra.mxu0 0.0
    %315 = vmatpush.msra.mxu0 0.0
    %316 = vmatpush.msra.mxu0 0.0
    %317 = vmatpush.msra.mxu0 0.0
    %318 = vmatpush.msra.mxu0 0.0
    %319 = vmatpush.msra.mxu0 %v37
    %320 = vmatpush.msra.mxu0 %v36
    %321 = vmatpush.msra.mxu0 %v35
    %322 = vmatpush.msra.mxu0 %v34
    %323 = vmatmul.f32.gmra.mxu0 %v302
    %v324 = vpop.f32.mrf.mxu0
    %v325 = vadd.f32 %v300, %v324
    %326 = vmatmul.f32.gmra.mxu0 %v305
    %v327 = vpop.f32.mrf.mxu0
    %v328 = vadd.f32 %v300, %v327
    %329 = vdwg.mxu0
    %v330 = vadd.f32 %v18, %v325
    %v331 = vadd.f32 %v19, %v328
    %v333 = vsel %vm86, %v330, 0
    %v336 = vsel %vm86, %v331, 0
    %338 = vmatpush.msra.mxu0 0.0
    %339 = vmatpush.msra.mxu0 0.0
    %340 = vmatpush.msra.mxu0 0.0
    %341 = vmatpush.msra.mxu0 0.0
    %342 = vmatpush.msra.mxu0 0.0
    %343 = vmatpush.msra.mxu0 0.0
    %344 = vmatpush.msra.mxu0 0.0
    %345 = vmatpush.msra.mxu0 0.0
    %346 = vmatpush.msra.mxu0 0.0
    %347 = vmatpush.msra.mxu0 0.0
    %348 = vmatpush.msra.mxu0 0.0
    %349 = vmatpush.msra.mxu0 0.0
    %350 = vmatpush.msra.mxu0 %v49
    %351 = vmatpush.msra.mxu0 %v48
    %352 = vmatpush.msra.mxu0 %v47
    %353 = vmatpush.msra.mxu0 %v46
    %354 = vmatmul.f32.gmra.mxu0 %v333
    %v355 = vpop.f32.mrf.mxu0
    %v356 = vadd.f32 0.0, %v355
    %357 = vmatmul.f32.gmra.mxu0 %v336
    %v358 = vpop.f32.mrf.mxu0
    %v359 = vadd.f32 0.0, %v358
    %360 = vdwg.mxu0
    %v361 = vmul.f32 %v330, %v330
    %v362 = vmul.f32 %v331, %v331
    %v364 = vsel %vm86, %v361, 0
    %v367 = vsel %vm86, %v362, 0
    %369 = vmatpush.msra.mxu0 0.0
    %370 = vmatpush.msra.mxu0 0.0
    %371 = vmatpush.msra.mxu0 0.0
    %372 = vmatpush.msra.mxu0 0.0
    %373 = vmatpush.msra.mxu0 0.0
    %374 = vmatpush.msra.mxu0 0.0
    %375 = vmatpush.msra.mxu0 0.0
    %376 = vmatpush.msra.mxu0 0.0
    %377 = vmatpush.msra.mxu0 0.0
    %378 = vmatpush.msra.mxu0 0.0
    %379 = vmatpush.msra.mxu0 0.0
    %380 = vmatpush.msra.mxu0 0.0
    %381 = vmatpush.msra.mxu0 %v49
    %382 = vmatpush.msra.mxu0 %v48
    %383 = vmatpush.msra.mxu0 %v47
    %384 = vmatpush.msra.mxu0 %v46
    %385 = vmatmul.f32.gmra.mxu0 %v364
    %v386 = vpop.f32.mrf.mxu0
    %v387 = vadd.f32 0.0, %v386
    %388 = vmatmul.f32.gmra.mxu0 %v367
    %v389 = vpop.f32.mrf.mxu0
    %v390 = vadd.f32 0.0, %v389
    %391 = vdwg.mxu0
    %v392 = vmul.f32 %v356, %v356
    %v393 = vmul.f32 %v359, %v359
    %v394 = vsub.f32 %v387, %v392
    %v395 = vsub.f32 %v390, %v393
    %v396 = vmax.f32 %v394, 0.0
    %v397 = vmax.f32 %v395, 0.0
    %v398 = vsub.f32 %v330, %v356
    %v399 = vsub.f32 %v331, %v359
    %v400 = vadd.f32 %v396, 1e-05
    %v401 = vadd.f32 %v397, 1e-05
    %v402 = vrsqrt.pop %v400
    %v403 = vmul.f32 %v402, %v400
    %v404 = vmul.f32 %v403, %v402
    %v405 = vmul.f32 0.5, %v404
    %v406 = vsub.f32 1.5, %v405
    %v407 = vmul.f32 %v402, %v406
    %vm408 = vweird.f32 %v400
    %vm409 = vweird.f32 %v402
    %vm410 = vmor %vm408, %vm409
    %v411 = vsel %vm410, %v402, %v407
    %v412 = vrsqrt.pop %v401
    %v413 = vmul.f32 %v412, %v401
    %v414 = vmul.f32 %v413, %v412
    %v415 = vmul.f32 0.5, %v414
    %v416 = vsub.f32 1.5, %v415
    %v417 = vmul.f32 %v412, %v416
    %vm418 = vweird.f32 %v401
    %vm419 = vweird.f32 %v412
    %vm420 = vmor %vm418, %vm419
    %v421 = vsel %vm420, %v412, %v417
    %v422 = vmul.f32 %v398, %v411
    %v423 = vmul.f32 %v399, %v421
    %v424 = vperm.slane %v62, 0
    %v425 = vmul.f32 %v422, %v424
    %v426 = vmul.f32 %v423, %v424
    %v427 = vperm.slane %v63, 0
    %v428 = vadd.f32 %v425, %v427
    %v429 = vadd.f32 %v426, %v427
    %v430 = vperm.slane %v83, 0
    %v432 = vsel %vm86, %v428, 0
    %v435 = vsel %vm86, %v429, 0
    %437 = vmatpush.msra.mxu0 0.0
    %438 = vmatpush.msra.mxu0 0.0
    %439 = vmatpush.msra.mxu0 0.0
    %440 = vmatpush.msra.mxu0 0.0
    %441 = vmatpush.msra.mxu0 0.0
    %442 = vmatpush.msra.mxu0 0.0
    %443 = vmatpush.msra.mxu0 0.0
    %444 = vmatpush.msra.mxu0 0.0
    %445 = vmatpush.msra.mxu0 0.0
    %446 = vmatpush.msra.mxu0 0.0
    %447 = vmatpush.msra.mxu0 0.0
    %448 = vmatpush.msra.mxu0 0.0
    %449 = vmatpush.msra.mxu0 %v70
    %450 = vmatpush.msra.mxu0 %v69
    %451 = vmatpush.msra.mxu0 %v68
    %452 = vmatpush.msra.mxu0 %v67
    %453 = vmatmul.f32.gmra.mxu0 %v432
    %v454 = vpop.f32.mrf.mxu0
    %v455 = vadd.f32 %v430, %v454
    %456 = vmatmul.f32.gmra.mxu0 %v435
    %v457 = vpop.f32.mrf.mxu0
    %v458 = vadd.f32 %v430, %v457
    %459 = vdwg.mxu0
    %v460 = vmax.f32 %v455, 0.0
    %v461 = vmax.f32 %v458, 0.0
    %v462 = vperm.slane %v64, 0
    %v464 = vsel %vm237, %v460, 0
    %v467 = vsel %vm237, %v461, 0
    %469 = vmatpush.msra.mxu0 0.0
    %470 = vmatpush.msra.mxu0 0.0
    %471 = vmatpush.msra.mxu0 0.0
    %472 = vmatpush.msra.mxu0 0.0
    %473 = vmatpush.msra.mxu0 0.0
    %474 = vmatpush.msra.mxu0 0.0
    %475 = vmatpush.msra.mxu0 0.0
    %476 = vmatpush.msra.mxu0 0.0
    %477 = vmatpush.msra.mxu0 %v45
    %478 = vmatpush.msra.mxu0 %v44
    %479 = vmatpush.msra.mxu0 %v43
    %480 = vmatpush.msra.mxu0 %v42
    %481 = vmatpush.msra.mxu0 %v41
    %482 = vmatpush.msra.mxu0 %v40
    %483 = vmatpush.msra.mxu0 %v39
    %484 = vmatpush.msra.mxu0 %v38
    %485 = vmatmul.f32.gmra.mxu0 %v464
    %v486 = vpop.f32.mrf.mxu0
    %v487 = vadd.f32 %v462, %v486
    %488 = vmatmul.f32.gmra.mxu0 %v467
    %v489 = vpop.f32.mrf.mxu0
    %v490 = vadd.f32 %v462, %v489
    %491 = vdwg.mxu0
    %v492 = vadd.f32 %v428, %v487
    %v493 = vadd.f32 %v429, %v490
    %v495 = vsel %vm86, %v492, 0
    %v498 = vsel %vm86, %v493, 0
    %500 = vmatpush.msra.mxu0 0.0
    %501 = vmatpush.msra.mxu0 0.0
    %502 = vmatpush.msra.mxu0 0.0
    %503 = vmatpush.msra.mxu0 0.0
    %504 = vmatpush.msra.mxu0 0.0
    %505 = vmatpush.msra.mxu0 0.0
    %506 = vmatpush.msra.mxu0 0.0
    %507 = vmatpush.msra.mxu0 0.0
    %508 = vmatpush.msra.mxu0 0.0
    %509 = vmatpush.msra.mxu0 0.0
    %510 = vmatpush.msra.mxu0 0.0
    %511 = vmatpush.msra.mxu0 0.0
    %512 = vmatpush.msra.mxu0 %v49
    %513 = vmatpush.msra.mxu0 %v48
    %514 = vmatpush.msra.mxu0 %v47
    %515 = vmatpush.msra.mxu0 %v46
    %516 = vmatmul.f32.gmra.mxu0 %v495
    %v517 = vpop.f32.mrf.mxu0
    %v518 = vadd.f32 0.0, %v517
    %519 = vmatmul.f32.gmra.mxu0 %v498
    %v520 = vpop.f32.mrf.mxu0
    %v521 = vadd.f32 0.0, %v520
    %522 = vdwg.mxu0
    %v523 = vmul.f32 %v492, %v492
    %v524 = vmul.f32 %v493, %v493
    %v526 = vsel %vm86, %v523, 0
    %v529 = vsel %vm86, %v524, 0
    %531 = vmatpush.msra.mxu0 0.0
    %532 = vmatpush.msra.mxu0 0.0
    %533 = vmatpush.msra.mxu0 0.0
    %534 = vmatpush.msra.mxu0 0.0
    %535 = vmatpush.msra.mxu0 0.0
    %536 = vmatpush.msra.mxu0 0.0
    %537 = vmatpush.msra.mxu0 0.0
    %538 = vmatpush.msra.mxu0 0.0
    %539 = vmatpush.msra.mxu0 0.0
    %540 = vmatpush.msra.mxu0 0.0
    %541 = vmatpush.msra.mxu0 0.0
    %542 = vmatpush.msra.mxu0 0.0
    %543 = vmatpush.msra.mxu0 %v49
    %544 = vmatpush.msra.mxu0 %v48
    %545 = vmatpush.msra.mxu0 %v47
    %546 = vmatpush.msra.mxu0 %v46
    %547 = vmatmul.f32.gmra.mxu0 %v526
    %v548 = vpop.f32.mrf.mxu0
    %v549 = vadd.f32 0.0, %v548
    %550 = vmatmul.f32.gmra.mxu0 %v529
    %v551 = vpop.f32.mrf.mxu0
    %v552 = vadd.f32 0.0, %v551
    %553 = vdwg.mxu0
    %v554 = vmul.f32 %v518, %v518
    %v555 = vmul.f32 %v521, %v521
    %v556 = vsub.f32 %v549, %v554
    %v557 = vsub.f32 %v552, %v555
    %v558 = vmax.f32 %v556, 0.0
    %v559 = vmax.f32 %v557, 0.0
    %v560 = vsub.f32 %v492, %v518
    %v561 = vsub.f32 %v493, %v521
    %v562 = vadd.f32 %v558, 1e-05
    %v563 = vadd.f32 %v559, 1e-05
    %v564 = vrsqrt.pop %v562
    %v565 = vmul.f32 %v564, %v562
    %v566 = vmul.f32 %v565, %v564
    %v567 = vmul.f32 0.5, %v566
    %v568 = vsub.f32 1.5, %v567
    %v569 = vmul.f32 %v564, %v568
    %vm570 = vweird.f32 %v562
    %vm571 = vweird.f32 %v564
    %vm572 = vmor %vm570, %vm571
    %v573 = vsel %vm572, %v564, %v569
    %v574 = vrsqrt.pop %v563
    %v575 = vmul.f32 %v574, %v563
    %v576 = vmul.f32 %v575, %v574
    %v577 = vmul.f32 0.5, %v576
    %v578 = vsub.f32 1.5, %v577
    %v579 = vmul.f32 %v574, %v578
    %vm580 = vweird.f32 %v563
    %vm581 = vweird.f32 %v574
    %vm582 = vmor %vm580, %vm581
    %v583 = vsel %vm582, %v574, %v579
    %v584 = vmul.f32 %v560, %v573
    %v585 = vmul.f32 %v561, %v583
    %v586 = vperm.slane %v65, 0
    %v587 = vmul.f32 %v584, %v586
    %v588 = vmul.f32 %v585, %v586
    %v589 = vperm.slane %v66, 0
    %v590 = vadd.f32 %v587, %v589
    %v591 = vadd.f32 %v588, %v589
    %v592 = vperm.slane %v84, 0
    %v594 = vsel %vm86, %v590, 0
    %v597 = vsel %vm86, %v591, 0
    %599 = vmatpush.msra.mxu0 0.0
    %600 = vmatpush.msra.mxu0 0.0
    %601 = vmatpush.msra.mxu0 0.0
    %602 = vmatpush.msra.mxu0 0.0
    %603 = vmatpush.msra.mxu0 0.0
    %604 = vmatpush.msra.mxu0 0.0
    %605 = vmatpush.msra.mxu0 0.0
    %606 = vmatpush.msra.mxu0 0.0
    %607 = vmatpush.msra.mxu0 0.0
    %608 = vmatpush.msra.mxu0 0.0
    %609 = vmatpush.msra.mxu0 0.0
    %610 = vmatpush.msra.mxu0 0.0
    %611 = vmatpush.msra.mxu0 %v74
    %612 = vmatpush.msra.mxu0 %v73
    %613 = vmatpush.msra.mxu0 %v72
    %614 = vmatpush.msra.mxu0 %v71
    %615 = vmatmul.f32.gmra.mxu0 %v594
    %v616 = vpop.f32.mrf.mxu0
    %v617 = vadd.f32 %v592, %v616
    %618 = vmatmul.f32.gmra.mxu0 %v597
    %v619 = vpop.f32.mrf.mxu0
    %v620 = vadd.f32 %v592, %v619
    %621 = vdwg.mxu0
    %622 = vst.msk [vmem:[#allocation2] sm:$0xff] %vm237, %v617
    %623 = vst.msk [vmem:[#allocation2 + $0x8] sm:$0xff] %vm237, %v620
    // Predicated region
    $region18: #{decoder_forward.1} parent=1 // pred_check
      _
    $region19: #{decoder_forward.1} parent=1 // pred_check_branch
      %625 = sbr.rel (0) target = $region21
    $region20: #{decoder_forward.1} parent=1 // pred_region
      %627 = vsyncadd [#allocation3], 0
      %s628 = sshll.u32 [#allocation2], 4
      %s629 = int_to_ptr.vmem [resolvable:$true] %s628
      %s630 = sshll.u32 %s4, 4
      %s631 = int_to_ptr.hbm [resolvable:$true] %s630
      %636 = dma.vmem_to_hbm [thread:$0]  %s629, 256, %s631, [#allocation3], 128, 128, 8
    $region21: #{decoder_forward.1} parent=1 // pred_fallthru
      _
    // Predicated region
    $region22: #{decoder_forward.1} parent=1 // pred_check
      _
    $region23: #{decoder_forward.1} parent=1 // pred_check_branch
      %638 = sbr.rel (0) target = $region25
    $region24: #{decoder_forward.1} parent=1 // pred_region
      %640 = dma.done [#allocation3], 256
    $region25: #{decoder_forward.1} parent=1 // pred_fallthru
      _
    %641 = vsyncpa [#allocation3], 1

</llo_original>
